<compile_context>
chip_gen: v7x
topology: tpu7x:2x2x1
jax: 0.10.0
libtpu: 0.0.40
codegen_flags: <defaults>
</compile_context>

<pallas_src>
import functools

import jax
import jax.numpy as jnp
from jax.experimental import pallas as pl
from jax.experimental.pallas import tpu as pltpu

_SUBLANE = 8
_LANE = 128


def _round_up(x: int, m: int) -> int:
    return ((x + m - 1) // m) * m


def _maybe_cast(v, dtype):
    return v if dtype is None else v.astype(dtype)


def _resident_kernel(x_ref, w_ref, b_ref, o_ref, *, mxu_dtype):
    # x_ref: (TM, H)   w_ref: (H, H)   b_ref: (1, H)   o_ref: (TM, H)
    x = x_ref[...]
    y = jnp.dot(_maybe_cast(x, mxu_dtype), _maybe_cast(w_ref[...], mxu_dtype),
                preferred_element_type=jnp.float32)
    y = y + b_ref[...]                         # f32 via promotion, no dead casts
    o_ref[...] = (x + y).astype(o_ref.dtype)   # residual add


def _ntiled_kernel(xk_ref, xr_ref, w_ref, b_ref, o_ref, *, mxu_dtype):
    # xk_ref: (TM, H) K-operand   xr_ref: (TM, TN) residual slice
    # w_ref: (H, TN)   b_ref: (1, TN)   o_ref: (TM, TN)
    y = jnp.dot(_maybe_cast(xk_ref[...], mxu_dtype),
                _maybe_cast(w_ref[...], mxu_dtype),
                preferred_element_type=jnp.float32)
    y = y + b_ref[...]
    o_ref[...] = (xr_ref[...] + y).astype(o_ref.dtype)


def residual_linear(x, w, b, *, tm: int = 1024, tn: int = 512,
                    mxu_operand_dtype=None, single_buffer_weights: bool = True):
    """y = x + (x @ w + b), fused in a single Pallas TPU kernel.

    x: (B, S, H)   w: (H, H) stored (in, out)   b: (H,)
    Dtype-generic: pass bf16 x/w/b for a ~2x HBM-traffic win on a
    bandwidth-bound kernel. mxu_operand_dtype=jnp.bfloat16 casts the matmul
    operands in-kernel (v5e MXU throughput) with f32 accumulation kept.
    """
    B, S, H = x.shape
    M = B * S
    x2d = x.reshape(M, H)
    b2d = b.reshape(1, H)
    xb = x.dtype.itemsize
    wb = w.dtype.itemsize

    # ---- generation-aware VMEM budget --------------------------------------
    try:
        vmem_cap = int(pltpu.get_tpu_info().vmem_capacity_bytes)
    except Exception:
        vmem_cap = 64 * 1024 * 1024       # conservative: v7x per-TensorCore VMEM
    budget = (3 * vmem_cap) // 4          # ~96 MiB on v5e/v6e, ~48 MiB on v7x

    w_bufs = 1 if single_buffer_weights else 2
    m_cap = _round_up(M, _SUBLANE)

    def est_resident(tm_: int) -> int:
        # x-tile + out-tile double-buffered, W/b single-buffered residents.
        return 4 * tm_ * H * xb + w_bufs * (H * H + H) * wb

    # ---- row-tile sizing for the resident-W schedule ------------------------
    tm_r = max(_SUBLANE, min(_round_up(tm, _SUBLANE), m_cap))
    # Grow toward the HBM-roofline plateau (fewer, larger DMA tiles).
    while tm_r * 2 <= min(2048, m_cap) and est_resident(tm_r * 2) <= budget:
        tm_r *= 2
    # Keep >= 4 row tiles when M allows so the "parallel" axis can be split
    # across TensorCores (v7x megacore); never drop below 256 rows for this.
    while tm_r > 256 and pl.cdiv(M, tm_r) < 4:
        tm_r = max(256, ((tm_r // 2) // _SUBLANE) * _SUBLANE)
    # Shrink to fit the budget; below 256 rows switch to the N-tiled schedule.
    while tm_r > 256 and est_resident(tm_r) > budget:
        tm_r = max(256, ((tm_r // 2) // _SUBLANE) * _SUBLANE)

    if est_resident(tm_r) <= budget:
        # ---- common case: W + b resident in VMEM, 1-D grid over rows --------
        est = est_resident(tm_r)
        grid = (pl.cdiv(M, tm_r),)
        kernel = functools.partial(_resident_kernel, mxu_dtype=mxu_operand_dtype)
        const_kwargs = (dict(pipeline_mode=pl.Buffered(1))
                        if single_buffer_weights else {})
        in_specs = [
            pl.BlockSpec((tm_r, H), lambda i: (i, 0)),                # x rows
            pl.BlockSpec((H, H), lambda i: (0, 0), **const_kwargs),   # W resident
            pl.BlockSpec((1, H), lambda i: (0, 0), **const_kwargs),   # b resident
        ]
        out_spec = pl.BlockSpec((tm_r, H), lambda i: (i, 0))
        operands = (x2d, w, b2d)
        dim_sem = ("parallel",)
        bytes_accessed = 2 * M * H * xb + (H * H + H) * wb
    else:
        # ---- large H: tile W's output dim over an N grid axis ---------------
        tn_ = min(_round_up(tn, 256), _round_up(H, _LANE))
        tm_n = max(_SUBLANE, min(_round_up(min(tm, 512), _SUBLANE), m_cap))

        def est_ntiled(tm_: int, tn2: int) -> int:
            return (2 * tm_ * H * xb            # x as K operand (streamed)
                    + 2 * tm_ * tn2 * xb        # x residual tile
                    + 2 * (H * tn2 + tn2) * wb  # W / b column blocks
                    + 2 * tm_ * tn2 * xb)       # output tile

        while tn_ > 256 and est_ntiled(tm_n, tn_) > budget:
            tn_ = max(256, tn_ // 2)
        while tm_n > 256 and est_ntiled(tm_n, tn_) > budget:
            tm_n = max(256, ((tm_n // 2) // _SUBLANE) * _SUBLANE)
        while tn_ > _LANE and est_ntiled(tm_n, tn_) > budget:
            tn_ = max(_LANE, tn_ // 2)
        while tm_n > _SUBLANE and est_ntiled(tm_n, tn_) > budget:
            tm_n = max(_SUBLANE, ((tm_n // 2) // _SUBLANE) * _SUBLANE)
        # TODO(synk): for H so large that even the (TM, H) x block blows VMEM,
        # also tile K with an f32 VMEM accumulator instead of shrinking TM.

        est = est_ntiled(tm_n, tn_)
        num_n = pl.cdiv(H, tn_)
        grid = (num_n, pl.cdiv(M, tm_n))   # N outer: W block resident per M sweep
        kernel = functools.partial(_ntiled_kernel, mxu_dtype=mxu_operand_dtype)
        in_specs = [
            pl.BlockSpec((tm_n, H), lambda j, i: (i, 0)),     # x (K operand)
            pl.BlockSpec((tm_n, tn_), lambda j, i: (i, j)),   # x (residual slice)
            pl.BlockSpec((H, tn_), lambda j, i: (0, j)),      # W column block
            pl.BlockSpec((1, tn_), lambda j, i: (0, j)),      # b column block
        ]
        out_spec = pl.BlockSpec((tm_n, tn_), lambda j, i: (i, j))
        operands = (x2d, x2d, w, b2d)
        dim_sem = ("arbitrary", "parallel")
        bytes_accessed = (num_n + 2) * M * H * xb + (H * H + H) * wb

    # vmem limit: >= working set, <= capacity minus Mosaic scratch headroom.
    vmem_limit = max(32 * 1024 * 1024, est + (8 << 20))
    vmem_limit = min(vmem_limit, vmem_cap - (8 << 20))
    vmem_limit = int(max(vmem_limit, est))

    cost = pl.CostEstimate(
        flops=2 * M * H * H + 2 * M * H,    # unpadded: matmul + bias + residual
        transcendentals=0,
        bytes_accessed=int(bytes_accessed),
    )

    out2d = pl.pallas_call(
        kernel,
        out_shape=jax.ShapeDtypeStruct((M, H), x.dtype),
        grid_spec=pltpu.PrefetchScalarGridSpec(
            num_scalar_prefetch=0,
            grid=grid,
            in_specs=in_specs,
            out_specs=out_spec,
        ),
        compiler_params=pltpu.CompilerParams(
            dimension_semantics=dim_sem,
            vmem_limit_bytes=vmem_limit,
        ),
        cost_estimate=cost,
    )(*operands)

    return out2d.reshape(B, S, H)


if __name__ == "__main__":
    # Small deterministic setup: batch=2, seq=8, hidden=32.
    B, S, H = 2, 8, 32
    key = jax.random.PRNGKey(0)
    kx, kw, kb = jax.random.split(key, 3)

    x = jax.random.normal(kx, (B, S, H), dtype=jnp.float32)
    # Deterministic init mimicking nn.Linear's uniform(-1/sqrt(H), 1/sqrt(H)).
    bound = 1.0 / (H ** 0.5)
    # Stored as (in, out) = W.T relative to PyTorch's (out, in) convention.
    w = jax.random.uniform(kw, (H, H), minval=-bound, maxval=bound,
                           dtype=jnp.float32)
    b = jax.random.uniform(kb, (H,), minval=-bound, maxval=bound,
                           dtype=jnp.float32)

    fn = jax.jit(functools.partial(residual_linear, single_buffer_weights=True))
    try:
        y = jax.block_until_ready(fn(x, w, b))
    except Exception:
        # Fallback for jax versions where pipeline_mode=pl.Buffered(1) is not
        # accepted on top-level pallas_call BlockSpecs.
        fn = jax.jit(functools.partial(residual_linear,
                                       single_buffer_weights=False))
        y = jax.block_until_ready(fn(x, w, b))

    # Reference (pure JAX) for the Residual semantics: x + module(x).
    y_ref = x + (jnp.einsum("bsh,hk->bsk", x, w) + b)
    assert y.shape == x.shape and y.dtype == x.dtype
    assert jnp.allclose(y, y_ref, atol=1e-5, rtol=1e-5)

    print("KERNEL_OK")
</pallas_src>

<mosaic_0001>
module attributes {stable_mosaic.version = 11 : i64} {
  func.func @_resident_kernel(%arg0: i32, %arg1: memref<16x32xf32, #tpu.memory_space<vmem>>, %arg2: memref<32x32xf32, #tpu.memory_space<vmem>>, %arg3: memref<1x32xf32, #tpu.memory_space<vmem>>, %arg4: memref<16x32xf32, #tpu.memory_space<vmem>>) attributes {dimension_semantics = [#tpu.dimension_semantics<parallel>], iteration_bounds = array<i64: 1>, scalar_prefetch = 0 : i64, scratch_operands = 0 : i64, tpu.core_type = #tpu.core_type<tc>, window_params = [{transform_indices = @transform_0, window_bounds = array<i64: 16, 32>}, {pipeline_mode = #tpu.pipeline_mode<synchronous>, transform_indices = @transform_1, window_bounds = array<i64: 32, 32>}, {pipeline_mode = #tpu.pipeline_mode<synchronous>, transform_indices = @transform_2, window_bounds = array<i64: 1, 32>}, {transform_indices = @transform_3, window_bounds = array<i64: 16, 32>}]} {
    %c0 = arith.constant 0 : index
    %c0_0 = arith.constant 0 : index
    %0 = vector.load %arg1[%c0, %c0_0] : memref<16x32xf32, #tpu.memory_space<vmem>>, vector<16x32xf32>
    %c0_1 = arith.constant 0 : index
    %c0_2 = arith.constant 0 : index
    %1 = vector.load %arg2[%c0_1, %c0_2] : memref<32x32xf32, #tpu.memory_space<vmem>>, vector<32x32xf32>
    %cst = arith.constant dense<0.000000e+00> : vector<16x32xf32>
    %2 = tpu.matmul %0, %1, %cst {dimension_numbers = #tpu.dot_dimension_numbers<[1], [0], [0], [1], [0, 0, 1, 1], [], []>} : vector<16x32xf32>, vector<32x32xf32>, vector<16x32xf32> -> vector<16x32xf32>
    %c0_3 = arith.constant 0 : index
    %c0_4 = arith.constant 0 : index
    %3 = vector.load %arg3[%c0_3, %c0_4] : memref<1x32xf32, #tpu.memory_space<vmem>>, vector<1x32xf32>
    %4 = vector.broadcast %3 : vector<1x32xf32> to vector<16x32xf32>
    %5 = arith.addf %2, %4 : vector<16x32xf32>
    %6 = arith.addf %0, %5 : vector<16x32xf32>
    %c0_5 = arith.constant 0 : index
    %c0_6 = arith.constant 0 : index
    %7 = vector.load %arg4[%c0_5, %c0_6] : memref<16x32xf32, #tpu.memory_space<vmem>>, vector<16x32xf32>
    tpu.vector_store %arg4[%c0_5, %c0_6], %6 {strides = array<i32>} : memref<16x32xf32, #tpu.memory_space<vmem>>, vector<16x32xf32>,
    return
  }
  func.func @transform_0(%arg0: i32) -> (i32, i32) {
    %c0_i32 = arith.constant 0 : i32
    %c0_i32_0 = arith.constant 0 : i32
    return %arg0, %c0_i32 : i32, i32
  }
  func.func @transform_1(%arg0: i32) -> (i32, i32) {
    %c0_i32 = arith.constant 0 : i32
    %c0_i32_0 = arith.constant 0 : i32
    %c0_i32_1 = arith.constant 0 : i32
    return %c0_i32, %c0_i32_0 : i32, i32
  }
  func.func @transform_2(%arg0: i32) -> (i32, i32) {
    %c0_i32 = arith.constant 0 : i32
    %c0_i32_0 = arith.constant 0 : i32
    %c0_i32_1 = arith.constant 0 : i32
    return %c0_i32, %c0_i32_0 : i32, i32
  }
  func.func @transform_3(%arg0: i32) -> (i32, i32) {
    %c0_i32 = arith.constant 0 : i32
    %c0_i32_0 = arith.constant 0 : i32
    return %arg0, %c0_i32 : i32, i32
  }
}

module attributes {stable_mosaic.version = 11 : i64} {
  func.func @_resident_kernel(%arg0: i32, %arg1: memref<16x32xf32, #tpu.memory_space<vmem>>, %arg2: memref<32x32xf32, #tpu.memory_space<vmem>>, %arg3: memref<1x32xf32, #tpu.memory_space<vmem>>, %arg4: memref<16x32xf32, #tpu.memory_space<vmem>>) attributes {dimension_semantics = [#tpu.dimension_semantics<parallel>], iteration_bounds = array<i64: 1>, scalar_prefetch = 0 : i64, scratch_operands = 0 : i64, tpu.core_type = #tpu.core_type<tc>, window_params = [{transform_indices = @transform_0, window_bounds = array<i64: 16, 32>}, {pipeline_mode = #tpu.pipeline_mode<synchronous>, transform_indices = @transform_1, window_bounds = array<i64: 32, 32>}, {pipeline_mode = #tpu.pipeline_mode<synchronous>, transform_indices = @transform_2, window_bounds = array<i64: 1, 32>}, {transform_indices = @transform_3, window_bounds = array<i64: 16, 32>}]} {
    %c0 = arith.constant 0 : index
    %c0_0 = arith.constant 0 : index
    %0 = vector.load %arg1[%c0, %c0_0] : memref<16x32xf32, #tpu.memory_space<vmem>>, vector<16x32xf32>
    %c0_1 = arith.constant 0 : index
    %c0_2 = arith.constant 0 : index
    %1 = vector.load %arg2[%c0_1, %c0_2] : memref<32x32xf32, #tpu.memory_space<vmem>>, vector<32x32xf32>
    %cst = arith.constant dense<0.000000e+00> : vector<16x32xf32>
    %2 = tpu.matmul %0, %1, %cst {dimension_numbers = #tpu.dot_dimension_numbers<[1], [0], [0], [1], [0, 0, 1, 1], [], []>} : vector<16x32xf32>, vector<32x32xf32>, vector<16x32xf32> -> vector<16x32xf32>
    %c0_3 = arith.constant 0 : index
    %c0_4 = arith.constant 0 : index
    %3 = vector.load %arg3[%c0_3, %c0_4] : memref<1x32xf32, #tpu.memory_space<vmem>>, vector<1x32xf32>
    %4 = vector.broadcast %3 : vector<1x32xf32> to vector<16x32xf32>
    %5 = arith.addf %2, %4 : vector<16x32xf32>
    %6 = arith.addf %0, %5 : vector<16x32xf32>
    %c0_5 = arith.constant 0 : index
    %c0_6 = arith.constant 0 : index
    %7 = vector.load %arg4[%c0_5, %c0_6] : memref<16x32xf32, #tpu.memory_space<vmem>>, vector<16x32xf32>
    tpu.vector_store %arg4[%c0_5, %c0_6], %6 {strides = array<i32>} : memref<16x32xf32, #tpu.memory_space<vmem>>, vector<16x32xf32>,
    return
  }
  func.func @transform_0(%arg0: i32) -> (i32, i32) {
    %c0_i32 = arith.constant 0 : i32
    %c0_i32_0 = arith.constant 0 : i32
    return %arg0, %c0_i32 : i32, i32
  }
  func.func @transform_1(%arg0: i32) -> (i32, i32) {
    %c0_i32 = arith.constant 0 : i32
    %c0_i32_0 = arith.constant 0 : i32
    %c0_i32_1 = arith.constant 0 : i32
    return %c0_i32, %c0_i32_0 : i32, i32
  }
  func.func @transform_2(%arg0: i32) -> (i32, i32) {
    %c0_i32 = arith.constant 0 : i32
    %c0_i32_0 = arith.constant 0 : i32
    %c0_i32_1 = arith.constant 0 : i32
    return %c0_i32, %c0_i32_0 : i32, i32
  }
  func.func @transform_3(%arg0: i32) -> (i32, i32) {
    %c0_i32 = arith.constant 0 : i32
    %c0_i32_0 = arith.constant 0 : i32
    return %arg0, %c0_i32 : i32, i32
  }
}

</mosaic_0001>

<llo_original>
// kernel: residual_linear.1
$region0: #{residual_linear.1}
  #allocation0 [shape = 'u32[]', space=smem, size = 0x4, offset = 0x4, fixed_abs, tag = 'smem constant byte address 0x4 - core index']
  #allocation1 [shape = 'u32[144,128]{1,0:T(1,128)}', space=vmem, size = 0x12000, scoped, tag = 'internal scratch']
  %s0 = inlined_call_operand.hbm [shape: f32[16,32], index: 0, kind: input, shape index: {}]
  %s1 = inlined_call_operand.hbm [shape: f32[32,32], index: 1, kind: input, shape index: {}]
  %s2 = inlined_call_operand.vmem [shape: f32[1,32], index: 2, kind: input, shape index: {}]
  %s3 = inlined_call_operand.hbm [shape: f32[16,32], index: 3, kind: output, shape index: {}]
  %s4 = sld [smem:[#allocation0]]
  $region30: #{residual_linear.1} parent=0
    _
  %s6 = ssub.s32 1, %s4
  %s7 = scalar_select 0, %s6, %s4
  $region1: #{residual_linear.1} parent=0
    #allocation2 [shape = 'u8[8192]{0}', space=vmem, size = 0x2000, scoped, tag = 'input window, operand 0, single buffered']
    #allocation3 [shape = 's32[1]{0}', space=sflag, size = 0x4, scoped, tag = 'scoped memory for residual_linear.1']
    #allocation4 [shape = 's32[1]{0}', space=sflag, size = 0x4, scoped, tag = 'scoped memory for residual_linear.1']
    #allocation5 [shape = 'u8[16384]{0}', space=vmem, size = 0x4000, scoped, tag = 'input window, operand 1, single buffered']
    #allocation6 [shape = 's32[1]{0}', space=sflag, size = 0x4, scoped, tag = 'scoped memory for residual_linear.1']
    #allocation7 [shape = 'u8[8192]{0}', space=vmem, size = 0x2000, scoped, tag = 'output window, operand 0, single buffered']
    %8 = vsyncpa [#allocation3], 0
    %9 = vsyncpa [#allocation6], 0
    %10 = vsyncpa [#allocation4], 0
    // Predicated region
    $region2: #{residual_linear.1} parent=1 // pred_check
      _
    $region3: #{residual_linear.1} parent=1 // pred_check_branch
      %12 = sbr.rel (0) target = $region5
    $region4: #{residual_linear.1} parent=1 // pred_region
      %s14 = ssub.s32 256, 256
      %15 = vsyncadd [#allocation3], %s14
      %s16 = sshll.u32 [#allocation2], 4
      %s17 = int_to_ptr.vmem [resolvable:$true] %s16
      %22 = dma.hbm_to_vmem [thread:$0]  %s0, 256, %s17, [#allocation3], 128, 128, 8
    $region5: #{residual_linear.1} parent=1 // pred_fallthru
      _
    // Predicated region
    $region6: #{residual_linear.1} parent=1 // pred_check
      _
    $region7: #{residual_linear.1} parent=1 // pred_check_branch
      %24 = sbr.rel (0) target = $region9
    $region8: #{residual_linear.1} parent=1 // pred_region
      %s26 = ssub.s32 512, 512
      %27 = vsyncadd [#allocation6], %s26
      %s28 = sshll.u32 [#allocation5], 4
      %s29 = int_to_ptr.vmem [resolvable:$true] %s28
      %34 = dma.hbm_to_vmem [thread:$0]  %s1, 512, %s29, [#allocation6], 128, 128, 8
    $region9: #{residual_linear.1} parent=1 // pred_fallthru
      _
    // Predicated region
    $region10: #{residual_linear.1} parent=1 // pred_check
      _
    $region11: #{residual_linear.1} parent=1 // pred_check_branch
      %36 = sbr.rel (0) target = $region13
    $region12: #{residual_linear.1} parent=1 // pred_region
      _
    $region13: #{residual_linear.1} parent=1 // pred_fallthru
      _
    // Predicated region
    $region14: #{residual_linear.1} parent=1 // pred_check
      _
    $region15: #{residual_linear.1} parent=1 // pred_check_branch
      %38 = sbr.rel (0) target = $region17
    $region16: #{residual_linear.1} parent=1 // pred_region
      %39 = dma.done [#allocation3], 256
    $region17: #{residual_linear.1} parent=1 // pred_fallthru
      _
    // Predicated region
    $region18: #{residual_linear.1} parent=1 // pred_check
      _
    $region19: #{residual_linear.1} parent=1 // pred_check_branch
      %41 = sbr.rel (0) target = $region21
    $region20: #{residual_linear.1} parent=1 // pred_region
      %42 = dma.done [#allocation6], 512
    $region21: #{residual_linear.1} parent=1 // pred_fallthru
      _
    %v43 = vld [vmem:[#allocation2] sm:$0xff]
    %v44 = vld [vmem:[#allocation2 + $0x8] sm:$0xff]
    %v45 = vld [vmem:[#allocation5] sm:$0xff]
    %v46 = vld [vmem:[#allocation5 + $0x8] sm:$0xff]
    %v47 = vld [vmem:[#allocation5 + $0x10] sm:$0xff]
    %v48 = vld [vmem:[#allocation5 + $0x18] sm:$0xff]
    %v49 = vld [vmem:[%s2] sm:$0x1]
    %v51 = vlaneseq
    %v52 = vshrl.u32 %v51, 7
    %v53 = vsub.s32 0, %v52
    %v54 = vrot.slane %v49, %v53
    %vm56 = vcmask 261120
    %v58 = vsel %vm56, %v43, 0
    %v61 = vsel %vm56, %v44, 0
    %63 = vmatprep.subr.mxu0 0.0
    %64 = vmatpush1.msra.mxu0 %v45
    %65 = vmatprep.subr.mxu0 0.0
    %66 = vmatpush1.msra.mxu0 %v46
    %67 = vmatprep.subr.mxu0 0.0
    %68 = vmatpush1.msra.mxu0 %v47
    %69 = vmatprep.subr.mxu0 0.0
    %70 = vmatpush1.msra.mxu0 %v48
    %71 = vmatprep.subr.mxu0 0.0
    %72 = vmatpush1.msra.mxu0 0.0
    %73 = vmatprep.subr.mxu0 0.0
    %74 = vmatpush1.msra.mxu0 0.0
    %75 = vmatprep.subr.mxu0 0.0
    %76 = vmatpush1.msra.mxu0 0.0
    %77 = vmatprep.subr.mxu0 0.0
    %78 = vmatpush1.msra.mxu0 0.0
    %79 = vmatprep.subr.mxu0 0.0
    %80 = vmatpush1.msra.mxu0 0.0
    %81 = vmatprep.subr.mxu0 0.0
    %82 = vmatpush1.msra.mxu0 0.0
    %83 = vmatprep.subr.mxu0 0.0
    %84 = vmatpush1.msra.mxu0 0.0
    %85 = vmatprep.subr.mxu0 0.0
    %86 = vmatpush1.msra.mxu0 0.0
    %87 = vmatprep.subr.mxu0 0.0
    %88 = vmatpush1.msra.mxu0 0.0
    %89 = vmatprep.subr.mxu0 0.0
    %90 = vmatpush1.msra.mxu0 0.0
    %91 = vmatprep.subr.mxu0 0.0
    %92 = vmatpush1.msra.mxu0 0.0
    %93 = vmatprep.subr.mxu0 0.0
    %94 = vmatpush1.msra.mxu0 0.0
    %95 = vmatprep.subr.mxu0 0.0
    %96 = vmatpush1.msra.mxu0 0.0
    %97 = vmatprep.subr.mxu0 0.0
    %98 = vmatpush1.msra.mxu0 0.0
    %99 = vmatprep.subr.mxu0 0.0
    %100 = vmatpush1.msra.mxu0 0.0
    %101 = vmatprep.subr.mxu0 0.0
    %102 = vmatpush1.msra.mxu0 0.0
    %103 = vmatprep.subr.mxu0 0.0
    %104 = vmatpush1.msra.mxu0 0.0
    %105 = vmatprep.subr.mxu0 0.0
    %106 = vmatpush1.msra.mxu0 0.0
    %107 = vmatprep.subr.mxu0 0.0
    %108 = vmatpush1.msra.mxu0 0.0
    %109 = vmatprep.subr.mxu0 0.0
    %110 = vmatpush1.msra.mxu0 0.0
    %111 = vmatprep.subr.mxu0 0.0
    %112 = vmatpush1.msra.mxu0 0.0
    %113 = vmatprep.subr.mxu0 0.0
    %114 = vmatpush1.msra.mxu0 0.0
    %115 = vmatprep.subr.mxu0 0.0
    %116 = vmatpush1.msra.mxu0 0.0
    %117 = vmatprep.subr.mxu0 0.0
    %118 = vmatpush1.msra.mxu0 0.0
    %119 = vmatprep.subr.mxu0 0.0
    %120 = vmatpush1.msra.mxu0 0.0
    %121 = vmatprep.subr.mxu0 0.0
    %122 = vmatpush1.msra.mxu0 0.0
    %123 = vmatprep.subr.mxu0 0.0
    %124 = vmatpush1.msra.mxu0 0.0
    %125 = vmatprep.subr.mxu0 0.0
    %126 = vmatpush1.msra.mxu0 0.0
    %127 = vmatprep.mubr.f32.mxu0 0.0
    %128 = vmatmul.mubr.f32.gmra.mrb[0].mxu0 %v58
    %v129 = vpop.f32.mrb[0].mxu0
    %v130 = vadd.f32 %v54, %v129
    %v131 = vpop.f32.mrb[0].mxu0
    %132 = vmatprep.mubr.f32.mxu0 0.0
    %133 = vmatmul.mubr.f32.gmra.mrb[0].mxu0 %v61
    %v134 = vpop.f32.mrb[0].mxu0
    %v135 = vadd.f32 %v54, %v134
    %v136 = vpop.f32.mrb[0].mxu0
    %137 = vdwg.mxu0
    %v138 = vadd.f32 %v43, %v130
    %v139 = vadd.f32 %v44, %v135
    %140 = vst.msk [vmem:[#allocation7] sm:$0xff] %vm56, %v138
    %141 = vst.msk [vmem:[#allocation7 + $0x8] sm:$0xff] %vm56, %v139
    // Predicated region
    $region22: #{residual_linear.1} parent=1 // pred_check
      _
    $region23: #{residual_linear.1} parent=1 // pred_check_branch
      %143 = sbr.rel (0) target = $region25
    $region24: #{residual_linear.1} parent=1 // pred_region
      %s145 = ssub.s32 256, 256
      %146 = vsyncadd [#allocation4], %s145
      %s147 = sshll.u32 [#allocation7], 4
      %s148 = int_to_ptr.vmem [resolvable:$true] %s147
      %153 = dma.vmem_to_hbm [thread:$0]  %s148, 256, %s3, [#allocation4], 128, 128, 8
    $region25: #{residual_linear.1} parent=1 // pred_fallthru
      _
    // Predicated region
    $region26: #{residual_linear.1} parent=1 // pred_check
      _
    $region27: #{residual_linear.1} parent=1 // pred_check_branch
      %155 = sbr.rel (0) target = $region29
    $region28: #{residual_linear.1} parent=1 // pred_region
      %156 = dma.done [#allocation4], 256
    $region29: #{residual_linear.1} parent=1 // pred_fallthru
      _
    %157 = vsyncpa [#allocation3], 1
    %158 = vsyncpa [#allocation6], 1
    %159 = vsyncpa [#allocation4], 1

// kernel: residual_linear.1
$region0: #{residual_linear.1}
  #allocation0 [shape = 'u32[]', space=smem, size = 0x4, offset = 0x4, fixed_abs, tag = 'smem constant byte address 0x4 - core index']
  #allocation1 [shape = 'u32[144,128]{1,0:T(1,128)}', space=vmem, size = 0x12000, scoped, tag = 'internal scratch']
  %s0 = inlined_call_operand.hbm [shape: f32[16,32], index: 0, kind: input, shape index: {}]
  %s1 = inlined_call_operand.hbm [shape: f32[32,32], index: 1, kind: input, shape index: {}]
  %s2 = inlined_call_operand.vmem [shape: f32[1,32], index: 2, kind: input, shape index: {}]
  %s3 = inlined_call_operand.hbm [shape: f32[16,32], index: 3, kind: output, shape index: {}]
  %s4 = sld [smem:[#allocation0]]
  $region30: #{residual_linear.1} parent=0
    _
  %s6 = ssub.s32 1, %s4
  %s7 = scalar_select 0, %s6, %s4
  $region1: #{residual_linear.1} parent=0
    #allocation2 [shape = 'u8[8192]{0}', space=vmem, size = 0x2000, scoped, tag = 'input window, operand 0, single buffered']
    #allocation3 [shape = 's32[1]{0}', space=sflag, size = 0x4, scoped, tag = 'scoped memory for residual_linear.1']
    #allocation4 [shape = 's32[1]{0}', space=sflag, size = 0x4, scoped, tag = 'scoped memory for residual_linear.1']
    #allocation5 [shape = 'u8[16384]{0}', space=vmem, size = 0x4000, scoped, tag = 'input window, operand 1, single buffered']
    #allocation6 [shape = 's32[1]{0}', space=sflag, size = 0x4, scoped, tag = 'scoped memory for residual_linear.1']
    #allocation7 [shape = 'u8[8192]{0}', space=vmem, size = 0x2000, scoped, tag = 'output window, operand 0, single buffered']
    %8 = vsyncpa [#allocation3], 0
    %9 = vsyncpa [#allocation6], 0
    %10 = vsyncpa [#allocation4], 0
    // Predicated region
    $region2: #{residual_linear.1} parent=1 // pred_check
      _
    $region3: #{residual_linear.1} parent=1 // pred_check_branch
      %12 = sbr.rel (0) target = $region5
    $region4: #{residual_linear.1} parent=1 // pred_region
      %s14 = ssub.s32 256, 256
      %15 = vsyncadd [#allocation3], %s14
      %s16 = sshll.u32 [#allocation2], 4
      %s17 = int_to_ptr.vmem [resolvable:$true] %s16
      %22 = dma.hbm_to_vmem [thread:$0]  %s0, 256, %s17, [#allocation3], 128, 128, 8
    $region5: #{residual_linear.1} parent=1 // pred_fallthru
      _
    // Predicated region
    $region6: #{residual_linear.1} parent=1 // pred_check
      _
    $region7: #{residual_linear.1} parent=1 // pred_check_branch
      %24 = sbr.rel (0) target = $region9
    $region8: #{residual_linear.1} parent=1 // pred_region
      %s26 = ssub.s32 512, 512
      %27 = vsyncadd [#allocation6], %s26
      %s28 = sshll.u32 [#allocation5], 4
      %s29 = int_to_ptr.vmem [resolvable:$true] %s28
      %34 = dma.hbm_to_vmem [thread:$0]  %s1, 512, %s29, [#allocation6], 128, 128, 8
    $region9: #{residual_linear.1} parent=1 // pred_fallthru
      _
    // Predicated region
    $region10: #{residual_linear.1} parent=1 // pred_check
      _
    $region11: #{residual_linear.1} parent=1 // pred_check_branch
      %36 = sbr.rel (0) target = $region13
    $region12: #{residual_linear.1} parent=1 // pred_region
      _
    $region13: #{residual_linear.1} parent=1 // pred_fallthru
      _
    // Predicated region
    $region14: #{residual_linear.1} parent=1 // pred_check
      _
    $region15: #{residual_linear.1} parent=1 // pred_check_branch
      %38 = sbr.rel (0) target = $region17
    $region16: #{residual_linear.1} parent=1 // pred_region
      %39 = dma.done [#allocation3], 256
    $region17: #{residual_linear.1} parent=1 // pred_fallthru
      _
    // Predicated region
    $region18: #{residual_linear.1} parent=1 // pred_check
      _
    $region19: #{residual_linear.1} parent=1 // pred_check_branch
      %41 = sbr.rel (0) target = $region21
    $region20: #{residual_linear.1} parent=1 // pred_region
      %42 = dma.done [#allocation6], 512
    $region21: #{residual_linear.1} parent=1 // pred_fallthru
      _
    %v43 = vld [vmem:[#allocation2] sm:$0xff]
    %v44 = vld [vmem:[#allocation2 + $0x8] sm:$0xff]
    %v45 = vld [vmem:[#allocation5] sm:$0xff]
    %v46 = vld [vmem:[#allocation5 + $0x8] sm:$0xff]
    %v47 = vld [vmem:[#allocation5 + $0x10] sm:$0xff]
    %v48 = vld [vmem:[#allocation5 + $0x18] sm:$0xff]
    %v49 = vld [vmem:[%s2] sm:$0x1]
    %v51 = vlaneseq
    %v52 = vshrl.u32 %v51, 7
    %v53 = vsub.s32 0, %v52
    %v54 = vrot.slane %v49, %v53
    %vm56 = vcmask 261120
    %v58 = vsel %vm56, %v43, 0
    %v61 = vsel %vm56, %v44, 0
    %63 = vmatprep.subr.mxu0 0.0
    %64 = vmatpush1.msra.mxu0 %v45
    %65 = vmatprep.subr.mxu0 0.0
    %66 = vmatpush1.msra.mxu0 %v46
    %67 = vmatprep.subr.mxu0 0.0
    %68 = vmatpush1.msra.mxu0 %v47
    %69 = vmatprep.subr.mxu0 0.0
    %70 = vmatpush1.msra.mxu0 %v48
    %71 = vmatprep.subr.mxu0 0.0
    %72 = vmatpush1.msra.mxu0 0.0
    %73 = vmatprep.subr.mxu0 0.0
    %74 = vmatpush1.msra.mxu0 0.0
    %75 = vmatprep.subr.mxu0 0.0
    %76 = vmatpush1.msra.mxu0 0.0
    %77 = vmatprep.subr.mxu0 0.0
    %78 = vmatpush1.msra.mxu0 0.0
    %79 = vmatprep.subr.mxu0 0.0
    %80 = vmatpush1.msra.mxu0 0.0
    %81 = vmatprep.subr.mxu0 0.0
    %82 = vmatpush1.msra.mxu0 0.0
    %83 = vmatprep.subr.mxu0 0.0
    %84 = vmatpush1.msra.mxu0 0.0
    %85 = vmatprep.subr.mxu0 0.0
    %86 = vmatpush1.msra.mxu0 0.0
    %87 = vmatprep.subr.mxu0 0.0
    %88 = vmatpush1.msra.mxu0 0.0
    %89 = vmatprep.subr.mxu0 0.0
    %90 = vmatpush1.msra.mxu0 0.0
    %91 = vmatprep.subr.mxu0 0.0
    %92 = vmatpush1.msra.mxu0 0.0
    %93 = vmatprep.subr.mxu0 0.0
    %94 = vmatpush1.msra.mxu0 0.0
    %95 = vmatprep.subr.mxu0 0.0
    %96 = vmatpush1.msra.mxu0 0.0
    %97 = vmatprep.subr.mxu0 0.0
    %98 = vmatpush1.msra.mxu0 0.0
    %99 = vmatprep.subr.mxu0 0.0
    %100 = vmatpush1.msra.mxu0 0.0
    %101 = vmatprep.subr.mxu0 0.0
    %102 = vmatpush1.msra.mxu0 0.0
    %103 = vmatprep.subr.mxu0 0.0
    %104 = vmatpush1.msra.mxu0 0.0
    %105 = vmatprep.subr.mxu0 0.0
    %106 = vmatpush1.msra.mxu0 0.0
    %107 = vmatprep.subr.mxu0 0.0
    %108 = vmatpush1.msra.mxu0 0.0
    %109 = vmatprep.subr.mxu0 0.0
    %110 = vmatpush1.msra.mxu0 0.0
    %111 = vmatprep.subr.mxu0 0.0
    %112 = vmatpush1.msra.mxu0 0.0
    %113 = vmatprep.subr.mxu0 0.0
    %114 = vmatpush1.msra.mxu0 0.0
    %115 = vmatprep.subr.mxu0 0.0
    %116 = vmatpush1.msra.mxu0 0.0
    %117 = vmatprep.subr.mxu0 0.0
    %118 = vmatpush1.msra.mxu0 0.0
    %119 = vmatprep.subr.mxu0 0.0
    %120 = vmatpush1.msra.mxu0 0.0
    %121 = vmatprep.subr.mxu0 0.0
    %122 = vmatpush1.msra.mxu0 0.0
    %123 = vmatprep.subr.mxu0 0.0
    %124 = vmatpush1.msra.mxu0 0.0
    %125 = vmatprep.subr.mxu0 0.0
    %126 = vmatpush1.msra.mxu0 0.0
    %127 = vmatprep.mubr.f32.mxu0 0.0
    %128 = vmatmul.mubr.f32.gmra.mrb[0].mxu0 %v58
    %v129 = vpop.f32.mrb[0].mxu0
    %v130 = vadd.f32 %v54, %v129
    %v131 = vpop.f32.mrb[0].mxu0
    %132 = vmatprep.mubr.f32.mxu0 0.0
    %133 = vmatmul.mubr.f32.gmra.mrb[0].mxu0 %v61
    %v134 = vpop.f32.mrb[0].mxu0
    %v135 = vadd.f32 %v54, %v134
    %v136 = vpop.f32.mrb[0].mxu0
    %137 = vdwg.mxu0
    %v138 = vadd.f32 %v43, %v130
    %v139 = vadd.f32 %v44, %v135
    %140 = vst.msk [vmem:[#allocation7] sm:$0xff] %vm56, %v138
    %141 = vst.msk [vmem:[#allocation7 + $0x8] sm:$0xff] %vm56, %v139
    // Predicated region
    $region22: #{residual_linear.1} parent=1 // pred_check
      _
    $region23: #{residual_linear.1} parent=1 // pred_check_branch
      %143 = sbr.rel (0) target = $region25
    $region24: #{residual_linear.1} parent=1 // pred_region
      %s145 = ssub.s32 256, 256
      %146 = vsyncadd [#allocation4], %s145
      %s147 = sshll.u32 [#allocation7], 4
      %s148 = int_to_ptr.vmem [resolvable:$true] %s147
      %153 = dma.vmem_to_hbm [thread:$0]  %s148, 256, %s3, [#allocation4], 128, 128, 8
    $region25: #{residual_linear.1} parent=1 // pred_fallthru
      _
    // Predicated region
    $region26: #{residual_linear.1} parent=1 // pred_check
      _
    $region27: #{residual_linear.1} parent=1 // pred_check_branch
      %155 = sbr.rel (0) target = $region29
    $region28: #{residual_linear.1} parent=1 // pred_region
      %156 = dma.done [#allocation4], 256
    $region29: #{residual_linear.1} parent=1 // pred_fallthru
      _
    %157 = vsyncpa [#allocation3], 1
    %158 = vsyncpa [#allocation6], 1
    %159 = vsyncpa [#allocation4], 1

</llo_original>
